<compile_context>
chip_gen: v5e
topology: v5e:2x2
jax: 0.10.0
libtpu: 0.0.40
codegen_flags: <defaults>
</compile_context>

<pallas_src>
import functools

import jax
import jax.numpy as jnp
from jax.experimental import pallas as pl
from jax.experimental.pallas import tpu as pltpu


_LANE = 128  # lane width: fc2's tiny output dim is padded to this for the matmul N dim


# ---------------------------------------------------------------------------
# Kernel
# ---------------------------------------------------------------------------
def policy_mlp_kernel(x_ref, w1t_ref, b1_ref, w2t_ref, b2_ref, mean_ref, *, tb, nb, a):
    # x_ref   : [B, S]     (resident full array)
    # w1t_ref : [S, H]     b1_ref : [1, H]
    # w2t_ref : [H, Ap]    b2_ref : [1, Ap]      (Ap = lane-padded action dim)
    # mean_ref: [tb, A]    (unpadded output block)
    if nb == 1:
        x = x_ref[...]
    else:
        # Resident x + in-kernel row slice: one small copy of x instead of a
        # per-step strided DMA of 16-byte rows. tb is a multiple of 8 here.
        row0 = pl.multiple_of(pl.program_id(0) * tb, tb)
        x = x_ref[pl.ds(row0, tb), :]

    # fc1: pre-transposed [S,H] operand -> direct [M,K]x[K,N] MXU lowering.
    h = jnp.dot(x, w1t_ref[...], preferred_element_type=jnp.float32)
    h = jnp.maximum(h + b1_ref[...], 0.0)          # bias + ReLU, f32 on VPU

    # fc2_mean: N padded to 128 lanes for the matmul; store only the real
    # `a` columns (cheap masked 2-lane vst — the output is a few KB total).
    mean = jnp.dot(h, w2t_ref[...], preferred_element_type=jnp.float32) + b2_ref[...]
    mean_ref[...] = mean[:, :a].astype(mean_ref.dtype)


# ---------------------------------------------------------------------------
# One-time parameter packing (OUT of the per-call hot path)
# ---------------------------------------------------------------------------
def prepack_params(w1, b1, w2, b2):
    """Pack PyTorch-layout params once.

    w1: [H, S], b1: [H]   (fc1)         ->  w1t  : [S, H],   b1r : [1, H]
    w2: [A, H], b2: [A]   (fc2_mean)    ->  w2tp : [H, Ap],  b2p : [1, Ap]
    Padded entries are exact zeros, so the unwritten lanes of the matmul
    result are exactly zero and never stored.
    """
    H, _ = w1.shape
    A = w2.shape[0]
    A_pad = max(_LANE, ((A + _LANE - 1) // _LANE) * _LANE)

    w1t = jnp.asarray(w1, jnp.float32).T                       # [S, H]
    b1r = jnp.asarray(b1, jnp.float32).reshape(1, H)           # [1, H]
    w2tp = (jnp.zeros((H, A_pad), jnp.float32)
            .at[:, :A].set(jnp.asarray(w2, jnp.float32).T))    # [H, Ap]
    b2p = (jnp.zeros((1, A_pad), jnp.float32)
           .at[0, :A].set(jnp.asarray(b2, jnp.float32)))       # [1, Ap]
    return w1t, b1r, w2tp, b2p


# ---------------------------------------------------------------------------
# Tiling policy
# ---------------------------------------------------------------------------
def _num_tensorcores():
    try:
        kind = jax.devices()[0].device_kind.lower().replace(" ", "")
    except Exception:  # pragma: no cover - defensive
        return 1
    return 2 if ("v7" in kind or "tpu7" in kind) else 1


def _batch_tiling(B):
    """Return (tb, nb): batch-tile rows and grid steps.

    Grid steps are a serial ~0.35us loop on single-TC v5e/v6e, so keep nb=1
    there.  Split only to (a) give both v7x TensorCores work at large B, or
    (b) cap per-step VMEM for very large batches.  When splitting, tb must be
    a multiple of 8 and divide B exactly (so the in-kernel row slice never
    goes out of bounds); otherwise fall back to a single full-batch block.
    """
    targets = []
    if _num_tensorcores() >= 2 and B >= 512:
        targets.append(B // 2)      # exactly one tile per v7x TensorCore
    if B > 4096:
        targets.append(4096)        # keep intermediates far below scoped VMEM
    if not targets:
        return B, 1
    tb = (min(targets) // 8) * 8
    while tb >= 8 and B % tb != 0:
        tb -= 8
    if tb < 8:
        return B, 1
    return tb, B // tb


# ---------------------------------------------------------------------------
# Forward
# ---------------------------------------------------------------------------
def policy_forward(x, w1t, b1, w2t_p, b2_p, episode=0, *, action_space):
    """Returns (action_mean [B, A], sigma scalar) defining Normal(action_mean, sigma).

    Takes params pre-packed by `prepack_params` (transpose/pad hoisted out of
    the hot path).
    """
    B, S = x.shape
    H = w1t.shape[1]
    A = action_space
    A_pad = w2t_p.shape[1]

    tb, nb = _batch_tiling(B)
    grid = (nb,)

    flops = 2 * B * S * H + 2 * B * H * A_pad
    bytes_accessed = 4 * (B * S + S * H + H + H * A_pad + A_pad + B * A)

    kernel = functools.partial(policy_mlp_kernel, tb=tb, nb=nb, a=A)

    action_mean = pl.pallas_call(
        kernel,
        out_shape=jax.ShapeDtypeStruct((B, A), jnp.float32),
        grid=grid,
        in_specs=[
            pl.BlockSpec((B, S), lambda i: (0, 0)),        # x: resident (B*S*4 bytes)
            pl.BlockSpec((S, H), lambda i: (0, 0)),        # w1^T: resident
            pl.BlockSpec((1, H), lambda i: (0, 0)),        # b1: resident
            pl.BlockSpec((H, A_pad), lambda i: (0, 0)),    # w2^T (lane-padded): resident
            pl.BlockSpec((1, A_pad), lambda i: (0, 0)),    # b2 (lane-padded): resident
        ],
        out_specs=pl.BlockSpec((tb, A), lambda i: (i, 0)), # unpadded output block
        compiler_params=pltpu.CompilerParams(
            dimension_semantics=("parallel",),             # 2-TC sharding on v7x when nb>1
        ),
        cost_estimate=pl.CostEstimate(
            flops=flops, transcendentals=0, bytes_accessed=bytes_accessed),
    )(x, w1t, b1, w2t_p, b2_p)

    # Scalar sigma; jnp.exp keeps this jit-safe if `episode` is a traced value.
    sigma = jnp.float32(10.0) * jnp.exp(jnp.float32(-0.0005) * episode)
    # TODO(synk): torch.distributions.Normal has no tensor compute in forward();
    # we return its defining parameters (action_mean, sigma) instead of an object.
    return action_mean, sigma


if __name__ == "__main__":
    key = jax.random.PRNGKey(0)
    batch = 8
    state_space = 4      # cart-pole-like observation
    hidden = 64
    action_space = 2

    k_x, k_w1, k_w2 = jax.random.split(key, 3)
    x = jax.random.normal(k_x, (batch, state_space), dtype=jnp.float32)

    # Parameter init mirroring Policy.init_weights(): weights ~ N(0,1), biases 0.
    w1 = jax.random.normal(k_w1, (hidden, state_space), dtype=jnp.float32)
    b1 = jnp.zeros((hidden,), dtype=jnp.float32)
    w2 = jax.random.normal(k_w2, (action_space, hidden), dtype=jnp.float32)
    b2 = jnp.zeros((action_space,), dtype=jnp.float32)

    # One-time packing (transpose + lane-pad), outside the per-call hot path.
    packed = prepack_params(w1, b1, w2, b2)
    packed = jax.block_until_ready(packed)
    w1t, b1r, w2tp, b2p = packed

    fwd = jax.jit(policy_forward, static_argnames=("action_space",))
    action_mean, sigma = fwd(x, w1t, b1r, w2tp, b2p, 0, action_space=action_space)
    jax.block_until_ready(action_mean)

    # Reference check in plain JAX (original PyTorch layout / math).
    ref = jnp.maximum(x @ w1.T + b1, 0.0) @ w2.T + b2
    assert action_mean.shape == (batch, action_space)
    assert jnp.allclose(action_mean, ref, atol=1e-4, rtol=1e-4)
    assert abs(float(sigma) - 10.0) < 1e-5

    print("KERNEL_OK")
</pallas_src>

<mosaic_0001>
module attributes {stable_mosaic.version = 11 : i64} {
  func.func @policy_mlp_kernel(%arg0: i32, %arg1: memref<8x4xf32, #tpu.memory_space<vmem>>, %arg2: memref<4x64xf32, #tpu.memory_space<vmem>>, %arg3: memref<1x64xf32, #tpu.memory_space<vmem>>, %arg4: memref<64x128xf32, #tpu.memory_space<vmem>>, %arg5: memref<1x128xf32, #tpu.memory_space<vmem>>, %arg6: memref<8x2xf32, #tpu.memory_space<vmem>>) attributes {dimension_semantics = [#tpu.dimension_semantics<parallel>], iteration_bounds = array<i64: 1>, scalar_prefetch = 0 : i64, scratch_operands = 0 : i64, tpu.core_type = #tpu.core_type<tc>, window_params = [{pipeline_mode = #tpu.pipeline_mode<synchronous>, transform_indices = @transform_0, window_bounds = array<i64: 8, 4>}, {pipeline_mode = #tpu.pipeline_mode<synchronous>, transform_indices = @transform_1, window_bounds = array<i64: 4, 64>}, {pipeline_mode = #tpu.pipeline_mode<synchronous>, transform_indices = @transform_2, window_bounds = array<i64: 1, 64>}, {pipeline_mode = #tpu.pipeline_mode<synchronous>, transform_indices = @transform_3, window_bounds = array<i64: 64, 128>}, {pipeline_mode = #tpu.pipeline_mode<synchronous>, transform_indices = @transform_4, window_bounds = array<i64: 1, 128>}, {transform_indices = @transform_5, window_bounds = array<i64: 8, 2>}]} {
    %c0 = arith.constant 0 : index
    %c0_0 = arith.constant 0 : index
    %0 = vector.load %arg1[%c0, %c0_0] : memref<8x4xf32, #tpu.memory_space<vmem>>, vector<8x4xf32>
    %c0_1 = arith.constant 0 : index
    %c0_2 = arith.constant 0 : index
    %1 = vector.load %arg2[%c0_1, %c0_2] : memref<4x64xf32, #tpu.memory_space<vmem>>, vector<4x64xf32>
    %cst = arith.constant dense<0.000000e+00> : vector<8x64xf32>
    %2 = tpu.matmul %0, %1, %cst {dimension_numbers = #tpu.dot_dimension_numbers<[1], [0], [0], [1], [0, 0, 1, 1], [], []>} : vector<8x4xf32>, vector<4x64xf32>, vector<8x64xf32> -> vector<8x64xf32>
    %c0_3 = arith.constant 0 : index
    %c0_4 = arith.constant 0 : index
    %3 = vector.load %arg3[%c0_3, %c0_4] : memref<1x64xf32, #tpu.memory_space<vmem>>, vector<1x64xf32>
    %4 = vector.broadcast %3 : vector<1x64xf32> to vector<8x64xf32>
    %5 = arith.addf %2, %4 : vector<8x64xf32>
    %cst_5 = arith.constant 0.000000e+00 : f32
    %6 = vector.broadcast %cst_5 : f32 to vector<8x64xf32>
    %7 = arith.maximumf %5, %6 : vector<8x64xf32>
    %c0_6 = arith.constant 0 : index
    %c0_7 = arith.constant 0 : index
    %8 = vector.load %arg4[%c0_6, %c0_7] : memref<64x128xf32, #tpu.memory_space<vmem>>, vector<64x128xf32>
    %cst_8 = arith.constant dense<0.000000e+00> : vector<8x128xf32>
    %9 = tpu.matmul %7, %8, %cst_8 {dimension_numbers = #tpu.dot_dimension_numbers<[1], [0], [0], [1], [0, 0, 1, 1], [], []>} : vector<8x64xf32>, vector<64x128xf32>, vector<8x128xf32> -> vector<8x128xf32>
    %c0_9 = arith.constant 0 : index
    %c0_10 = arith.constant 0 : index
    %10 = vector.load %arg5[%c0_9, %c0_10] : memref<1x128xf32, #tpu.memory_space<vmem>>, vector<1x128xf32>
    %11 = vector.broadcast %10 : vector<1x128xf32> to vector<8x128xf32>
    %12 = arith.addf %9, %11 : vector<8x128xf32>
    %13 = vector.extract_strided_slice %12 {offsets = [0, 0], sizes = [8, 2], strides = [1, 1]} : vector<8x128xf32> to vector<8x2xf32>
    %c0_11 = arith.constant 0 : index
    %c0_12 = arith.constant 0 : index
    %14 = vector.load %arg6[%c0_11, %c0_12] : memref<8x2xf32, #tpu.memory_space<vmem>>, vector<8x2xf32>
    tpu.vector_store %arg6[%c0_11, %c0_12], %13 {strides = array<i32>} : memref<8x2xf32, #tpu.memory_space<vmem>>, vector<8x2xf32>,
    return
  }
  func.func @transform_0(%arg0: i32) -> (i32, i32) {
    %c0_i32 = arith.constant 0 : i32
    %c0_i32_0 = arith.constant 0 : i32
    %c0_i32_1 = arith.constant 0 : i32
    return %c0_i32, %c0_i32_0 : i32, i32
  }
  func.func @transform_1(%arg0: i32) -> (i32, i32) {
    %c0_i32 = arith.constant 0 : i32
    %c0_i32_0 = arith.constant 0 : i32
    %c0_i32_1 = arith.constant 0 : i32
    return %c0_i32, %c0_i32_0 : i32, i32
  }
  func.func @transform_2(%arg0: i32) -> (i32, i32) {
    %c0_i32 = arith.constant 0 : i32
    %c0_i32_0 = arith.constant 0 : i32
    %c0_i32_1 = arith.constant 0 : i32
    return %c0_i32, %c0_i32_0 : i32, i32
  }
  func.func @transform_3(%arg0: i32) -> (i32, i32) {
    %c0_i32 = arith.constant 0 : i32
    %c0_i32_0 = arith.constant 0 : i32
    %c0_i32_1 = arith.constant 0 : i32
    return %c0_i32, %c0_i32_0 : i32, i32
  }
  func.func @transform_4(%arg0: i32) -> (i32, i32) {
    %c0_i32 = arith.constant 0 : i32
    %c0_i32_0 = arith.constant 0 : i32
    %c0_i32_1 = arith.constant 0 : i32
    return %c0_i32, %c0_i32_0 : i32, i32
  }
  func.func @transform_5(%arg0: i32) -> (i32, i32) {
    %c0_i32 = arith.constant 0 : i32
    %c0_i32_0 = arith.constant 0 : i32
    return %arg0, %c0_i32 : i32, i32
  }
}

</mosaic_0001>

<llo_original>
// kernel: policy_forward.1
$region0: #{policy_forward.1}
  #allocation0 [shape = 'u32[]', space=smem, size = 0x4, offset = 0x4, fixed_abs, tag = 'smem constant byte address 0x4 - core index']
  #allocation1 [shape = 'u32[72,128]{1,0:T(1,128)}', space=vmem, size = 0x9000, scoped, tag = 'internal scratch']
  %s0 = inlined_call_operand.vmem [shape: f32[8,4], index: 0, kind: input, shape index: {}]
  %s1 = inlined_call_operand.vmem [shape: f32[4,64], index: 1, kind: input, shape index: {}]
  %s2 = inlined_call_operand.vmem [shape: f32[1,64], index: 2, kind: input, shape index: {}]
  %s3 = inlined_call_operand.hbm [shape: f32[64,128], index: 3, kind: input, shape index: {}]
  %s4 = inlined_call_operand.vmem [shape: f32[1,128], index: 4, kind: input, shape index: {}]
  %s5 = inlined_call_operand.vmem [shape: f32[8,2], index: 5, kind: output, shape index: {}]
  %s6 = sld [smem:[#allocation0]]
  $region34: #{policy_forward.1} parent=0
    _
  %s8 = ssub.s32 1, %s6
  %s9 = scalar_select 0, %s8, %s6
  $region1: #{policy_forward.1} parent=0
    #allocation2 [shape = 'u8[32768]{0}', space=vmem, size = 0x8000, scoped, tag = 'input window, operand 3, single buffered']
    #allocation3 [shape = 's32[1]{0}', space=sflag, size = 0x4, scoped, tag = 'scoped memory for policy_forward.1']
    %10 = vsyncpa [#allocation3], 0
    // Predicated region
    $region2: #{policy_forward.1} parent=1 // pred_check
      _
    $region3: #{policy_forward.1} parent=1 // pred_check_branch
      %12 = sbr.rel (0) target = $region5
    $region4: #{policy_forward.1} parent=1 // pred_region
      _
    $region5: #{policy_forward.1} parent=1 // pred_fallthru
      _
    // Predicated region
    $region6: #{policy_forward.1} parent=1 // pred_check
      _
    $region7: #{policy_forward.1} parent=1 // pred_check_branch
      %14 = sbr.rel (0) target = $region9
    $region8: #{policy_forward.1} parent=1 // pred_region
      _
    $region9: #{policy_forward.1} parent=1 // pred_fallthru
      _
    // Predicated region
    $region10: #{policy_forward.1} parent=1 // pred_check
      _
    $region11: #{policy_forward.1} parent=1 // pred_check_branch
      %16 = sbr.rel (0) target = $region13
    $region12: #{policy_forward.1} parent=1 // pred_region
      _
    $region13: #{policy_forward.1} parent=1 // pred_fallthru
      _
    // Predicated region
    $region14: #{policy_forward.1} parent=1 // pred_check
      _
    $region15: #{policy_forward.1} parent=1 // pred_check_branch
      %18 = sbr.rel (0) target = $region17
    $region16: #{policy_forward.1} parent=1 // pred_region
      %20 = vsyncadd [#allocation3], 0
      %s21 = sshll.u32 %s3, 4
      %s22 = int_to_ptr.hbm [resolvable:$true] %s21
      %s23 = sshll.u32 [#allocation2], 4
      %s24 = int_to_ptr.vmem [resolvable:$true] %s23
      %29 = dma.hbm_to_vmem [thread:$0]  %s22, 1024, %s24, [#allocation3], 128, 128, 8
    $region17: #{policy_forward.1} parent=1 // pred_fallthru
      _
    // Predicated region
    $region18: #{policy_forward.1} parent=1 // pred_check
      _
    $region19: #{policy_forward.1} parent=1 // pred_check_branch
      %31 = sbr.rel (0) target = $region21
    $region20: #{policy_forward.1} parent=1 // pred_region
      _
    $region21: #{policy_forward.1} parent=1 // pred_fallthru
      _
    // Predicated region
    $region22: #{policy_forward.1} parent=1 // pred_check
      _
    $region23: #{policy_forward.1} parent=1 // pred_check_branch
      %33 = sbr.rel (0) target = $region25
    $region24: #{policy_forward.1} parent=1 // pred_region
      %35 = dma.done [#allocation3], 1024
    $region25: #{policy_forward.1} parent=1 // pred_fallthru
      _
    %v36 = vld [vmem:[%s0] sm:$0xff]
    %v37 = vld [vmem:[%s1] sm:$0xf]
    %v38 = vld [vmem:[%s2] sm:$0x1]
    %v40 = vperm.slane %v38, 0
    %vm42 = vcmask 31744
    %v44 = vsel %vm42, %v36, 0
    %vm46 = vcmask 1043456
    %v48 = vsel %vm46, %v37, 0
    %50 = vmatpush.msra.mxu0 0.0
    %51 = vmatpush.msra.mxu0 0.0
    %52 = vmatpush.msra.mxu0 0.0
    %53 = vmatpush.msra.mxu0 0.0
    %54 = vmatpush.msra.mxu0 0.0
    %55 = vmatpush.msra.mxu0 0.0
    %56 = vmatpush.msra.mxu0 0.0
    %57 = vmatpush.msra.mxu0 0.0
    %58 = vmatpush.msra.mxu0 0.0
    %59 = vmatpush.msra.mxu0 0.0
    %60 = vmatpush.msra.mxu0 0.0
    %61 = vmatpush.msra.mxu0 0.0
    %62 = vmatpush.msra.mxu0 0.0
    %63 = vmatpush.msra.mxu0 0.0
    %64 = vmatpush.msra.mxu0 0.0
    %65 = vmatpush.msra.mxu0 %v48
    %66 = vmatmul.f32.gmra.mxu0 %v44
    %v67 = vpop.f32.mrf.mxu0
    %v68 = vadd.f32 %v40, %v67
    %69 = vdwg.mxu0
    %v70 = vmax.f32 %v68, 0.0
    %v71 = vld [vmem:[#allocation2] sm:$0xff]
    %v72 = vld [vmem:[#allocation2 + $0x8] sm:$0xff]
    %v73 = vld [vmem:[#allocation2 + $0x10] sm:$0xff]
    %v74 = vld [vmem:[#allocation2 + $0x18] sm:$0xff]
    %v75 = vld [vmem:[#allocation2 + $0x20] sm:$0xff]
    %v76 = vld [vmem:[#allocation2 + $0x28] sm:$0xff]
    %v77 = vld [vmem:[#allocation2 + $0x30] sm:$0xff]
    %v78 = vld [vmem:[#allocation2 + $0x38] sm:$0xff]
    %v79 = vld [vmem:[%s4] sm:$0x1]
    %v81 = vperm.slane %v79, 0
    %vm83 = vcmask 523264
    %v85 = vsel %vm83, %v70, 0
    %87 = vmatpush.msra.mxu0 0.0
    %88 = vmatpush.msra.mxu0 0.0
    %89 = vmatpush.msra.mxu0 0.0
    %90 = vmatpush.msra.mxu0 0.0
    %91 = vmatpush.msra.mxu0 0.0
    %92 = vmatpush.msra.mxu0 0.0
    %93 = vmatpush.msra.mxu0 0.0
    %94 = vmatpush.msra.mxu0 0.0
    %95 = vmatpush.msra.mxu0 %v78
    %96 = vmatpush.msra.mxu0 %v77
    %97 = vmatpush.msra.mxu0 %v76
    %98 = vmatpush.msra.mxu0 %v75
    %99 = vmatpush.msra.mxu0 %v74
    %100 = vmatpush.msra.mxu0 %v73
    %101 = vmatpush.msra.mxu0 %v72
    %102 = vmatpush.msra.mxu0 %v71
    %103 = vmatmul.f32.gmra.mxu0 %v85
    %v104 = vpop.f32.mrf.mxu0
    %v105 = vadd.f32 %v81, %v104
    %106 = vdwg.mxu0
    %vm107 = vcmask 15360
    %108 = vst.msk [vmem:[%s5] sm:$0xff] %vm107, %v105
    // Predicated region
    $region26: #{policy_forward.1} parent=1 // pred_check
      _
    $region27: #{policy_forward.1} parent=1 // pred_check_branch
      %110 = sbr.rel (0) target = $region29
    $region28: #{policy_forward.1} parent=1 // pred_region
      _
    $region29: #{policy_forward.1} parent=1 // pred_fallthru
      _
    // Predicated region
    $region30: #{policy_forward.1} parent=1 // pred_check
      _
    $region31: #{policy_forward.1} parent=1 // pred_check_branch
      %112 = sbr.rel (0) target = $region33
    $region32: #{policy_forward.1} parent=1 // pred_region
      _
    $region33: #{policy_forward.1} parent=1 // pred_fallthru
      _
    %113 = vsyncpa [#allocation3], 1

</llo_original>
